<compile_context>
chip_gen: v7x
topology: tpu7x:2x2x1
jax: 0.10.0
libtpu: 0.0.40
codegen_flags: <defaults>
</compile_context>

<pallas_src>
import functools
import math

import jax
import jax.numpy as jnp
from jax import lax
from jax.experimental import pallas as pl
from jax.experimental.pallas import tpu as pltpu


# ---------------------------------------------------------------------------
# Kernels 1 & 3: row-tiled linear  (M, K) @ (K, N) + (1, N) -> (M, N)
# ---------------------------------------------------------------------------
def _linear_kernel(x_ref, w_ref, b_ref, o_ref):
    x = x_ref[...].astype(jnp.bfloat16)          # bf16 MXU inputs
    w = w_ref[...].astype(jnp.bfloat16)
    acc = jnp.dot(x, w, preferred_element_type=jnp.float32)
    o_ref[...] = (acc + b_ref[...]).astype(o_ref.dtype)


def linear(x2d, w, b, *, out_dtype=jnp.float32, tm=512):
    M, K = x2d.shape
    _, N = w.shape
    tm = min(tm, M)                               # big row tile; amortize per-step overhead
    b2d = b.reshape(1, N).astype(jnp.float32)
    return pl.pallas_call(
        _linear_kernel,
        out_shape=jax.ShapeDtypeStruct((M, N), out_dtype),
        grid_spec=pltpu.PrefetchScalarGridSpec(
            num_scalar_prefetch=0,
            grid=(pl.cdiv(M, tm),),               # cdiv: no silently-dropped rows
            in_specs=[
                pl.BlockSpec((tm, K), lambda i: (i, 0)),
                pl.BlockSpec((K, N), lambda i: (0, 0)),
                pl.BlockSpec((1, N), lambda i: (0, 0)),
            ],
            out_specs=pl.BlockSpec((tm, N), lambda i: (i, 0)),
        ),
        compiler_params=pltpu.CompilerParams(
            dimension_semantics=("parallel",)
        ),
    )(x2d, w, b2d)


# ---------------------------------------------------------------------------
# Kernel 2: causal attention — all heads of one batch element per grid step.
# ---------------------------------------------------------------------------
def _attn_kernel(q_ref, k_ref, v_ref, o_ref, *, n_head):
    T, C = q_ref.shape
    hd = C // n_head
    scale = 1.0 / math.sqrt(hd)

    # Fold 1/sqrt(hd) into q: T*C multiplies instead of T*T per head.
    q = q_ref[...] * scale                        # bf16
    k = k_ref[...]
    v = v_ref[...]

    # Causal mask shared by all heads.
    row = lax.broadcasted_iota(jnp.int32, (T, T), 0)
    col = lax.broadcasted_iota(jnp.int32, (T, T), 1)
    causal = col <= row

    contract_last = (((1,), (1,)), ((), ()))      # q @ k^T without k.T copy
    ys = []
    for h in range(n_head):                       # static unroll: back-to-back MXU pushes
        lo = h * hd
        qh = q[:, lo:lo + hd]
        kh = k[:, lo:lo + hd]
        vh = v[:, lo:lo + hd]

        s = lax.dot_general(qh, kh, contract_last,
                            preferred_element_type=jnp.float32)   # (T, T) f32
        s = jnp.where(causal, s, -1e30)

        m = jnp.max(s, axis=-1, keepdims=True)
        p = jnp.exp(s - m)
        denom = jnp.sum(p, axis=-1, keepdims=True)
        p = (p * pl.reciprocal(denom, approx=True)).astype(v.dtype)  # bf16 for PV

        ys.append(jnp.dot(p, vh, preferred_element_type=jnp.float32))

    # Merged-head, lane-dense (T, C) store.
    o_ref[...] = jnp.concatenate(ys, axis=-1).astype(o_ref.dtype)


def causal_attention(qkv, n_head):
    # qkv: (B, T, 3C), last axis laid out as [q | k | v].
    B, T, C3 = qkv.shape
    C = C3 // 3
    kernel = functools.partial(_attn_kernel, n_head=n_head)

    # TODO(synk): for long sequences (T >~ 2048, especially v7x's 64 MiB VMEM)
    # switch to a flash-style KV-tiled grid with online-softmax scratch and
    # causal block skipping instead of materializing full (T, T) scores.

    q_spec = pl.BlockSpec((pl.Squeezed(), T, C), lambda b: (b, 0, 0))
    k_spec = pl.BlockSpec((pl.Squeezed(), T, C), lambda b: (b, 0, 1))
    v_spec = pl.BlockSpec((pl.Squeezed(), T, C), lambda b: (b, 0, 2))
    o_spec = pl.BlockSpec((pl.Squeezed(), T, C), lambda b: (b, 0, 0))

    return pl.pallas_call(
        kernel,
        out_shape=jax.ShapeDtypeStruct((B, T, C), jnp.bfloat16),
        grid_spec=pltpu.PrefetchScalarGridSpec(
            num_scalar_prefetch=0,
            grid=(B,),
            in_specs=[q_spec, k_spec, v_spec],
            out_specs=o_spec,
        ),
        compiler_params=pltpu.CompilerParams(
            dimension_semantics=("parallel",)
        ),
    )(qkv, qkv, qkv)


# ---------------------------------------------------------------------------
# Full forward pass (only free reshapes in the glue — no transposes)
# ---------------------------------------------------------------------------
def causal_self_attention(x, params, n_head):
    B, T, C = x.shape
    qkv = linear(x.reshape(B * T, C), params["w_attn"], params["b_attn"],
                 out_dtype=jnp.bfloat16)                      # (B*T, 3C) bf16
    y = causal_attention(qkv.reshape(B, T, 3 * C), n_head)    # (B, T, C) bf16
    out = linear(y.reshape(B * T, C), params["w_proj"], params["b_proj"],
                 out_dtype=jnp.float32)                       # (B*T, C) f32
    return out.reshape(B, T, C)


# ---------------------------------------------------------------------------
# Pure-JAX f32 reference (for correctness check)
# ---------------------------------------------------------------------------
def reference(x, params, n_head):
    B, T, C = x.shape
    hd = C // n_head
    qkv = x @ params["w_attn"] + params["b_attn"]
    q, k, v = jnp.split(qkv, 3, axis=2)
    q = q.reshape(B, T, n_head, hd).transpose(0, 2, 1, 3)
    k = k.reshape(B, T, n_head, hd).transpose(0, 2, 1, 3)
    v = v.reshape(B, T, n_head, hd).transpose(0, 2, 1, 3)
    s = jnp.einsum("bhqd,bhkd->bhqk", q, k) / math.sqrt(hd)
    mask = jnp.tril(jnp.ones((T, T), dtype=bool))
    s = jnp.where(mask, s, -jnp.inf)
    p = jax.nn.softmax(s, axis=-1)
    y = jnp.einsum("bhqk,bhkd->bhqd", p, v)
    y = y.transpose(0, 2, 1, 3).reshape(B, T, C)
    return y @ params["w_proj"] + params["b_proj"]


if __name__ == "__main__":
    # Small config consistent with the module: n_embd % n_head == 0
    B, T, C, n_head = 2, 128, 128, 4

    key = jax.random.PRNGKey(0)
    kx, k1, k2, k3, k4 = jax.random.split(key, 5)

    x = jax.random.normal(kx, (B, T, C), dtype=jnp.float32)

    params = {
        # c_attn: Linear(C, 3C) stored transposed as (in, out)
        "w_attn": jax.random.normal(k1, (C, 3 * C), dtype=jnp.float32) * 0.02,
        "b_attn": jax.random.normal(k2, (3 * C,), dtype=jnp.float32) * 0.02,
        # c_proj: Linear(C, C)
        "w_proj": jax.random.normal(k3, (C, C), dtype=jnp.float32) * 0.02,
        "b_proj": jax.random.normal(k4, (C,), dtype=jnp.float32) * 0.02,
    }

    out = jax.block_until_ready(causal_self_attention(x, params, n_head))
    ref = reference(x, params, n_head)

    assert out.shape == (B, T, C)
    max_err = float(jnp.max(jnp.abs(out - ref)))
    # bf16 MXU inputs (f32 accumulation) => slightly looser tolerance than f32.
    assert jnp.allclose(out, ref, atol=2e-2, rtol=2e-2), max_err
    print("KERNEL_OK")
</pallas_src>

<mosaic_0001>
module attributes {stable_mosaic.version = 11 : i64} {
  func.func @_linear_kernel(%arg0: i32, %arg1: memref<256x128xf32, #tpu.memory_space<vmem>>, %arg2: memref<128x384xf32, #tpu.memory_space<vmem>>, %arg3: memref<1x384xf32, #tpu.memory_space<vmem>>, %arg4: memref<256x384xbf16, #tpu.memory_space<vmem>>) attributes {dimension_semantics = [#tpu.dimension_semantics<parallel>], iteration_bounds = array<i64: 1>, scalar_prefetch = 0 : i64, scratch_operands = 0 : i64, tpu.core_type = #tpu.core_type<tc>, window_params = [{transform_indices = @transform_0, window_bounds = array<i64: 256, 128>}, {pipeline_mode = #tpu.pipeline_mode<synchronous>, transform_indices = @transform_1, window_bounds = array<i64: 128, 384>}, {pipeline_mode = #tpu.pipeline_mode<synchronous>, transform_indices = @transform_2, window_bounds = array<i64: 1, 384>}, {transform_indices = @transform_3, window_bounds = array<i64: 256, 384>}]} {
    %c0 = arith.constant 0 : index
    %c0_0 = arith.constant 0 : index
    %0 = vector.load %arg1[%c0, %c0_0] : memref<256x128xf32, #tpu.memory_space<vmem>>, vector<256x128xf32>
    %1 = arith.truncf %0 : vector<256x128xf32> to vector<256x128xbf16>
    %c0_1 = arith.constant 0 : index
    %c0_2 = arith.constant 0 : index
    %2 = vector.load %arg2[%c0_1, %c0_2] : memref<128x384xf32, #tpu.memory_space<vmem>>, vector<128x384xf32>
    %3 = arith.truncf %2 : vector<128x384xf32> to vector<128x384xbf16>
    %cst = arith.constant dense<0.000000e+00> : vector<256x384xf32>
    %4 = tpu.matmul %1, %3, %cst {dimension_numbers = #tpu.dot_dimension_numbers<[1], [0], [0], [1], [0, 0, 1, 1], [], []>} : vector<256x128xbf16>, vector<128x384xbf16>, vector<256x384xf32> -> vector<256x384xf32>
    %c0_3 = arith.constant 0 : index
    %c0_4 = arith.constant 0 : index
    %5 = vector.load %arg3[%c0_3, %c0_4] : memref<1x384xf32, #tpu.memory_space<vmem>>, vector<1x384xf32>
    %6 = vector.broadcast %5 : vector<1x384xf32> to vector<256x384xf32>
    %7 = arith.addf %4, %6 : vector<256x384xf32>
    %8 = arith.truncf %7 : vector<256x384xf32> to vector<256x384xbf16>
    %c0_5 = arith.constant 0 : index
    %c0_6 = arith.constant 0 : index
    %9 = vector.load %arg4[%c0_5, %c0_6] : memref<256x384xbf16, #tpu.memory_space<vmem>>, vector<256x384xbf16>
    tpu.vector_store %arg4[%c0_5, %c0_6], %8 {strides = array<i32>} : memref<256x384xbf16, #tpu.memory_space<vmem>>, vector<256x384xbf16>,
    return
  }
  func.func @transform_0(%arg0: i32) -> (i32, i32) {
    %c0_i32 = arith.constant 0 : i32
    %c0_i32_0 = arith.constant 0 : i32
    return %arg0, %c0_i32 : i32, i32
  }
  func.func @transform_1(%arg0: i32) -> (i32, i32) {
    %c0_i32 = arith.constant 0 : i32
    %c0_i32_0 = arith.constant 0 : i32
    %c0_i32_1 = arith.constant 0 : i32
    return %c0_i32, %c0_i32_0 : i32, i32
  }
  func.func @transform_2(%arg0: i32) -> (i32, i32) {
    %c0_i32 = arith.constant 0 : i32
    %c0_i32_0 = arith.constant 0 : i32
    %c0_i32_1 = arith.constant 0 : i32
    return %c0_i32, %c0_i32_0 : i32, i32
  }
  func.func @transform_3(%arg0: i32) -> (i32, i32) {
    %c0_i32 = arith.constant 0 : i32
    %c0_i32_0 = arith.constant 0 : i32
    return %arg0, %c0_i32 : i32, i32
  }
}

</mosaic_0001>

<llo_original>
// kernel: tpu_custom_call.1
$region0: #{tpu_custom_call.1}
  #allocation0 [shape = 'u32[]', space=smem, size = 0x4, offset = 0x4, fixed_abs, tag = 'smem constant byte address 0x4 - core index']
  #allocation1 [shape = 'u32[144,128]{1,0:T(1,128)}', space=vmem, size = 0x12000, scoped, tag = 'internal scratch']
  %s0 = inlined_call_operand.hbm [shape: f32[256,128], index: 0, kind: input, shape index: {}]
  %s1 = inlined_call_operand.hbm [shape: f32[128,384], index: 1, kind: input, shape index: {}]
  %s2 = inlined_call_operand.vmem [shape: f32[1,384], index: 2, kind: input, shape index: {}]
  %s3 = inlined_call_operand.hbm [shape: bf16[256,384], index: 3, kind: output, shape index: {}]
  %s4 = sld [smem:[#allocation0]]
  $region30: #{tpu_custom_call.1} parent=0
    _
  %s6 = ssub.s32 1, %s4
  %s7 = scalar_select 0, %s6, %s4
  $region1: #{tpu_custom_call.1} parent=0
    #allocation2 [shape = 'u8[131072]{0}', space=vmem, size = 0x20000, scoped, tag = 'input window, operand 0, single buffered']
    #allocation3 [shape = 's32[1]{0}', space=sflag, size = 0x4, scoped, tag = 'scoped memory for tpu_custom_call.1']
    #allocation4 [shape = 's32[1]{0}', space=sflag, size = 0x4, scoped, tag = 'scoped memory for tpu_custom_call.1']
    #allocation5 [shape = 'u8[196608]{0}', space=vmem, size = 0x30000, scoped, tag = 'input window, operand 1, single buffered']
    #allocation6 [shape = 's32[1]{0}', space=sflag, size = 0x4, scoped, tag = 'scoped memory for tpu_custom_call.1']
    #allocation7 [shape = 'u8[196608]{0}', space=vmem, size = 0x30000, scoped, tag = 'output window, operand 0, single buffered']
    %8 = vsyncpa [#allocation3], 0
    %9 = vsyncpa [#allocation6], 0
    %10 = vsyncpa [#allocation4], 0
    // Predicated region
    $region2: #{tpu_custom_call.1} parent=1 // pred_check
      _
    $region3: #{tpu_custom_call.1} parent=1 // pred_check_branch
      %12 = sbr.rel (0) target = $region5
    $region4: #{tpu_custom_call.1} parent=1 // pred_region
      %s14 = ssub.s32 4096, 4096
      %15 = vsyncadd [#allocation3], %s14
      %s16 = sshll.u32 [#allocation2], 4
      %s17 = int_to_ptr.vmem [resolvable:$true] %s16
      %22 = dma.hbm_to_vmem [thread:$0]  %s0, 4096, %s17, [#allocation3], 128, 128, 8
    $region5: #{tpu_custom_call.1} parent=1 // pred_fallthru
      _
    // Predicated region
    $region6: #{tpu_custom_call.1} parent=1 // pred_check
      _
    $region7: #{tpu_custom_call.1} parent=1 // pred_check_branch
      %24 = sbr.rel (0) target = $region9
    $region8: #{tpu_custom_call.1} parent=1 // pred_region
      %s26 = ssub.s32 6144, 6144
      %27 = vsyncadd [#allocation6], %s26
      %s28 = sshll.u32 [#allocation5], 4
      %s29 = int_to_ptr.vmem [resolvable:$true] %s28
      %34 = dma.hbm_to_vmem [thread:$0]  %s1, 6144, %s29, [#allocation6], 384, 384, 24
    $region9: #{tpu_custom_call.1} parent=1 // pred_fallthru
      _
    // Predicated region
    $region10: #{tpu_custom_call.1} parent=1 // pred_check
      _
    $region11: #{tpu_custom_call.1} parent=1 // pred_check_branch
      %36 = sbr.rel (0) target = $region13
    $region12: #{tpu_custom_call.1} parent=1 // pred_region
      _
    $region13: #{tpu_custom_call.1} parent=1 // pred_fallthru
      _
    // Predicated region
    $region14: #{tpu_custom_call.1} parent=1 // pred_check
      _
    $region15: #{tpu_custom_call.1} parent=1 // pred_check_branch
      %38 = sbr.rel (0) target = $region17
    $region16: #{tpu_custom_call.1} parent=1 // pred_region
      %39 = dma.done [#allocation3], 4096
    $region17: #{tpu_custom_call.1} parent=1 // pred_fallthru
      _
    // Predicated region
    $region18: #{tpu_custom_call.1} parent=1 // pred_check
      _
    $region19: #{tpu_custom_call.1} parent=1 // pred_check_branch
      %41 = sbr.rel (0) target = $region21
    $region20: #{tpu_custom_call.1} parent=1 // pred_region
      %42 = dma.done [#allocation6], 6144
    $region21: #{tpu_custom_call.1} parent=1 // pred_fallthru
      _
    %v44 = vld [vmem:[#allocation2] sm:$0xff]
    %v45 = vld [vmem:[#allocation2 + $0x8] sm:$0xff]
    %v46 = vld [vmem:[#allocation2 + $0x10] sm:$0xff]
    %v47 = vld [vmem:[#allocation2 + $0x18] sm:$0xff]
    %v48 = vld [vmem:[#allocation2 + $0x20] sm:$0xff]
    %v49 = vld [vmem:[#allocation2 + $0x28] sm:$0xff]
    %v50 = vld [vmem:[#allocation2 + $0x30] sm:$0xff]
    %v51 = vld [vmem:[#allocation2 + $0x38] sm:$0xff]
    %v52 = vld [vmem:[#allocation2 + $0x40] sm:$0xff]
    %v53 = vld [vmem:[#allocation2 + $0x48] sm:$0xff]
    %v54 = vld [vmem:[#allocation2 + $0x50] sm:$0xff]
    %v55 = vld [vmem:[#allocation2 + $0x58] sm:$0xff]
    %v56 = vld [vmem:[#allocation2 + $0x60] sm:$0xff]
    %v57 = vld [vmem:[#allocation2 + $0x68] sm:$0xff]
    %v58 = vld [vmem:[#allocation2 + $0x70] sm:$0xff]
    %v59 = vld [vmem:[#allocation2 + $0x78] sm:$0xff]
    %v60 = vld [vmem:[#allocation2 + $0x80] sm:$0xff]
    %v61 = vld [vmem:[#allocation2 + $0x88] sm:$0xff]
    %v62 = vld [vmem:[#allocation2 + $0x90] sm:$0xff]
    %v63 = vld [vmem:[#allocation2 + $0x98] sm:$0xff]
    %v64 = vld [vmem:[#allocation2 + $0xa0] sm:$0xff]
    %v65 = vld [vmem:[#allocation2 + $0xa8] sm:$0xff]
    %v66 = vld [vmem:[#allocation2 + $0xb0] sm:$0xff]
    %v67 = vld [vmem:[#allocation2 + $0xb8] sm:$0xff]
    %v68 = vld [vmem:[#allocation2 + $0xc0] sm:$0xff]
    %v69 = vld [vmem:[#allocation2 + $0xc8] sm:$0xff]
    %v70 = vld [vmem:[#allocation2 + $0xd0] sm:$0xff]
    %v71 = vld [vmem:[#allocation2 + $0xd8] sm:$0xff]
    %v72 = vld [vmem:[#allocation2 + $0xe0] sm:$0xff]
    %v73 = vld [vmem:[#allocation2 + $0xe8] sm:$0xff]
    %v74 = vld [vmem:[#allocation2 + $0xf0] sm:$0xff]
    %v75 = vld [vmem:[#allocation2 + $0xf8] sm:$0xff]
    %v76 = vpack.c.bf16 %v45, %v44
    %v77 = vpack.c.bf16 %v47, %v46
    %v78 = vpack.c.bf16 %v49, %v48
    %v79 = vpack.c.bf16 %v51, %v50
    %v80 = vpack.c.bf16 %v53, %v52
    %v81 = vpack.c.bf16 %v55, %v54
    %v82 = vpack.c.bf16 %v57, %v56
    %v83 = vpack.c.bf16 %v59, %v58
    %v84 = vpack.c.bf16 %v61, %v60
    %v85 = vpack.c.bf16 %v63, %v62
    %v86 = vpack.c.bf16 %v65, %v64
    %v87 = vpack.c.bf16 %v67, %v66
    %v88 = vpack.c.bf16 %v69, %v68
    %v89 = vpack.c.bf16 %v71, %v70
    %v90 = vpack.c.bf16 %v73, %v72
    %v91 = vpack.c.bf16 %v75, %v74
    %v92 = vld [vmem:[#allocation5] sm:$0xff]
    %v93 = vld [vmem:[#allocation5 + $0x8] sm:$0xff]
    %v94 = vld [vmem:[#allocation5 + $0x10] sm:$0xff]
    %v95 = vld [vmem:[#allocation5 + $0x18] sm:$0xff]
    %v96 = vld [vmem:[#allocation5 + $0x20] sm:$0xff]
    %v97 = vld [vmem:[#allocation5 + $0x28] sm:$0xff]
    %v98 = vld [vmem:[#allocation5 + $0x30] sm:$0xff]
    %v99 = vld [vmem:[#allocation5 + $0x38] sm:$0xff]
    %v100 = vld [vmem:[#allocation5 + $0x40] sm:$0xff]
    %v101 = vld [vmem:[#allocation5 + $0x48] sm:$0xff]
    %v102 = vld [vmem:[#allocation5 + $0x50] sm:$0xff]
    %v103 = vld [vmem:[#allocation5 + $0x58] sm:$0xff]
    %v104 = vld [vmem:[#allocation5 + $0x60] sm:$0xff]
    %v105 = vld [vmem:[#allocation5 + $0x68] sm:$0xff]
    %v106 = vld [vmem:[#allocation5 + $0x70] sm:$0xff]
    %v107 = vld [vmem:[#allocation5 + $0x78] sm:$0xff]
    %v108 = vld [vmem:[#allocation5 + $0x80] sm:$0xff]
    %v109 = vld [vmem:[#allocation5 + $0x88] sm:$0xff]
    %v110 = vld [vmem:[#allocation5 + $0x90] sm:$0xff]
    %v111 = vld [vmem:[#allocation5 + $0x98] sm:$0xff]
    %v112 = vld [vmem:[#allocation5 + $0xa0] sm:$0xff]
    %v113 = vld [vmem:[#allocation5 + $0xa8] sm:$0xff]
    %v114 = vld [vmem:[#allocation5 + $0xb0] sm:$0xff]
    %v115 = vld [vmem:[#allocation5 + $0xb8] sm:$0xff]
    %v116 = vld [vmem:[#allocation5 + $0xc0] sm:$0xff]
    %v117 = vld [vmem:[#allocation5 + $0xc8] sm:$0xff]
    %v118 = vld [vmem:[#allocation5 + $0xd0] sm:$0xff]
    %v119 = vld [vmem:[#allocation5 + $0xd8] sm:$0xff]
    %v120 = vld [vmem:[#allocation5 + $0xe0] sm:$0xff]
    %v121 = vld [vmem:[#allocation5 + $0xe8] sm:$0xff]
    %v122 = vld [vmem:[#allocation5 + $0xf0] sm:$0xff]
    %v123 = vld [vmem:[#allocation5 + $0xf8] sm:$0xff]
    %v124 = vld [vmem:[#allocation5 + $0x100] sm:$0xff]
    %v125 = vld [vmem:[#allocation5 + $0x108] sm:$0xff]
    %v126 = vld [vmem:[#allocation5 + $0x110] sm:$0xff]
    %v127 = vld [vmem:[#allocation5 + $0x118] sm:$0xff]
    %v128 = vld [vmem:[#allocation5 + $0x120] sm:$0xff]
    %v129 = vld [vmem:[#allocation5 + $0x128] sm:$0xff]
    %v130 = vld [vmem:[#allocation5 + $0x130] sm:$0xff]
    %v131 = vld [vmem:[#allocation5 + $0x138] sm:$0xff]
    %v132 = vld [vmem:[#allocation5 + $0x140] sm:$0xff]
    %v133 = vld [vmem:[#allocation5 + $0x148] sm:$0xff]
    %v134 = vld [vmem:[#allocation5 + $0x150] sm:$0xff]
    %v135 = vld [vmem:[#allocation5 + $0x158] sm:$0xff]
    %v136 = vld [vmem:[#allocation5 + $0x160] sm:$0xff]
    %v137 = vld [vmem:[#allocation5 + $0x168] sm:$0xff]
    %v138 = vld [vmem:[#allocation5 + $0x170] sm:$0xff]
    %v139 = vld [vmem:[#allocation5 + $0x178] sm:$0xff]
    %v140 = vpack.c.bf16 %v95, %v92
    %v141 = vpack.c.bf16 %v96, %v93
    %v142 = vpack.c.bf16 %v97, %v94
    %v143 = vpack.c.bf16 %v101, %v98
    %v144 = vpack.c.bf16 %v102, %v99
    %v145 = vpack.c.bf16 %v103, %v100
    %v146 = vpack.c.bf16 %v107, %v104
    %v147 = vpack.c.bf16 %v108, %v105
    %v148 = vpack.c.bf16 %v109, %v106
    %v149 = vpack.c.bf16 %v113, %v110
    %v150 = vpack.c.bf16 %v114, %v111
    %v151 = vpack.c.bf16 %v115, %v112
    %v152 = vpack.c.bf16 %v119, %v116
    %v153 = vpack.c.bf16 %v120, %v117
    %v154 = vpack.c.bf16 %v121, %v118
    %v155 = vpack.c.bf16 %v125, %v122
    %v156 = vpack.c.bf16 %v126, %v123
    %v157 = vpack.c.bf16 %v127, %v124
    %v158 = vpack.c.bf16 %v131, %v128
    %v159 = vpack.c.bf16 %v132, %v129
    %v160 = vpack.c.bf16 %v133, %v130
    %v161 = vpack.c.bf16 %v137, %v134
    %v162 = vpack.c.bf16 %v138, %v135
    %v163 = vpack.c.bf16 %v139, %v136
    %v164 = vld [vmem:[%s2] sm:$0x7]
    %v166 = vlaneseq
    %v167 = vshrl.u32 %v166, 7
    %v168 = vsub.s32 0, %v167
    %v169 = vrot.slane %v164, %v168
    %v170 = vlaneseq
    %v171 = vshrl.u32 %v170, 7
    %v172 = vsub.s32 1, %v171
    %v173 = vrot.slane %v164, %v172
    %v174 = vlaneseq
    %v175 = vshrl.u32 %v174, 7
    %v176 = vsub.s32 2, %v175
    %v177 = vrot.slane %v164, %v176
    %181 = vmatprep.subr.bf16.mxu0 %v141
    %182 = vmatpush1.bf16.msra.mxu0 %v140
    %183 = vmatprep.subr.bf16.mxu0 %v144
    %184 = vmatpush1.bf16.msra.mxu0 %v143
    %185 = vmatprep.subr.bf16.mxu0 %v147
    %186 = vmatpush1.bf16.msra.mxu0 %v146
    %187 = vmatprep.subr.bf16.mxu0 %v150
    %188 = vmatpush1.bf16.msra.mxu0 %v149
    %189 = vmatprep.subr.bf16.mxu0 %v153
    %190 = vmatpush1.bf16.msra.mxu0 %v152
    %191 = vmatprep.subr.bf16.mxu0 %v156
    %192 = vmatpush1.bf16.msra.mxu0 %v155
    %193 = vmatprep.subr.bf16.mxu0 %v159
    %194 = vmatpush1.bf16.msra.mxu0 %v158
    %195 = vmatprep.subr.bf16.mxu0 %v162
    %196 = vmatpush1.bf16.msra.mxu0 %v161
    %197 = vmatprep.subr.bf16.mxu0 0
    %198 = vmatpush1.bf16.msra.mxu0 0
    %199 = vmatprep.subr.bf16.mxu0 0
    %200 = vmatpush1.bf16.msra.mxu0 0
    %201 = vmatprep.subr.bf16.mxu0 0
    %202 = vmatpush1.bf16.msra.mxu0 0
    %203 = vmatprep.subr.bf16.mxu0 0
    %204 = vmatpush1.bf16.msra.mxu0 0
    %205 = vmatprep.subr.bf16.mxu0 0
    %206 = vmatpush1.bf16.msra.mxu0 0
    %207 = vmatprep.subr.bf16.mxu0 0
    %208 = vmatpush1.bf16.msra.mxu0 0
    %209 = vmatprep.subr.bf16.mxu0 0
    %210 = vmatpush1.bf16.msra.mxu0 0
    %211 = vmatprep.subr.bf16.mxu0 0
    %212 = vmatpush1.bf16.msra.mxu0 0
    %213 = vmatprep.mubr.bf16.mxu0 0
    %214 = vmatmul.mubr.bf16.gmra.mrb[0].mxu0 %v76
    %v215 = vpop.f32.mrb[0].mxu0
    %v216 = vadd.f32 %v169, %v215
    %v217 = vpop.f32.mrb[0].mxu0
    %v218 = vadd.f32 %v173, %v217
    %v219 = vpop.f32.mrb[0].mxu0
    %v220 = vadd.f32 %v169, %v219
    %v221 = vpop.f32.mrb[0].mxu0
    %v222 = vadd.f32 %v173, %v221
    %223 = vmatprep.mubr.bf16.mxu0 0
    %224 = vmatmul.mubr.bf16.gmra.mrb[0].mxu0 %v77
    %v225 = vpop.f32.mrb[0].mxu0
    %v226 = vadd.f32 %v169, %v225
    %v227 = vpop.f32.mrb[0].mxu0
    %v228 = vadd.f32 %v173, %v227
    %v229 = vpop.f32.mrb[0].mxu0
    %v230 = vadd.f32 %v169, %v229
    %v231 = vpop.f32.mrb[0].mxu0
    %v232 = vadd.f32 %v173, %v231
    %233 = vmatprep.mubr.bf16.mxu0 0
    %234 = vmatmul.mubr.bf16.gmra.mrb[0].mxu0 %v78
    %v235 = vpop.f32.mrb[0].mxu0
    %v236 = vadd.f32 %v169, %v235
    %v237 = vpop.f32.mrb[0].mxu0
    %v238 = vadd.f32 %v173, %v237
    %v239 = vpop.f32.mrb[0].mxu0
    %v240 = vadd.f32 %v169, %v239
    %v241 = vpop.f32.mrb[0].mxu0
    %v242 = vadd.f32 %v173, %v241
    %243 = vmatprep.mubr.bf16.mxu0 0
    %244 = vmatmul.mubr.bf16.gmra.mrb[0].mxu0 %v79
    %v245 = vpop.f32.mrb[0].mxu0
    %v246 = vadd.f32 %v169, %v245
    %v247 = vpop.f32.mrb[0].mxu0
    %v248 = vadd.f32 %v173, %v247
    %v249 = vpop.f32.mrb[0].mxu0
    %v250 = vadd.f32 %v169, %v249
    %v251 = vpop.f32.mrb[0].mxu0
    %v252 = vadd.f32 %v173, %v251
    %253 = vmatprep.mubr.bf16.mxu0 0
    %254 = vmatmul.mubr.bf16.gmra.mrb[0].mxu0 %v80
    %v255 = vpop.f32.mrb[0].mxu0
    %v256 = vadd.f32 %v169, %v255
    %v257 = vpop.f32.mrb[0].mxu0
    %v258 = vadd.f32 %v173, %v257
    %v259 = vpop.f32.mrb[0].mxu0
    %v260 = vadd.f32 %v169, %v259
    %v261 = vpop.f32.mrb[0].mxu0
    %v262 = vadd.f32 %v173, %v261
    %263 = vmatprep.mubr.bf16.mxu0 0
    %264 = vmatmul.mubr.bf16.gmra.mrb[0].mxu0 %v81
    %v265 = vpop.f32.mrb[0].mxu0
    %v266 = vadd.f32 %v169, %v265
    %v267 = vpop.f32.mrb[0].mxu0
    %v268 = vadd.f32 %v173, %v267
    %v269 = vpop.f32.mrb[0].mxu0
    %v270 = vadd.f32 %v169, %v269
    %v271 = vpop.f32.mrb[0].mxu0
    %v272 = vadd.f32 %v173, %v271
    %273 = vmatprep.mubr.bf16.mxu0 0
    %274 = vmatmul.mubr.bf16.gmra.mrb[0].mxu0 %v82
    %v275 = vpop.f32.mrb[0].mxu0
    %v276 = vadd.f32 %v169, %v275
    %v277 = vpop.f32.mrb[0].mxu0
    %v278 = vadd.f32 %v173, %v277
    %v279 = vpop.f32.mrb[0].mxu0
    %v280 = vadd.f32 %v169, %v279
    %v281 = vpop.f32.mrb[0].mxu0
    %v282 = vadd.f32 %v173, %v281
    %283 = vmatprep.mubr.bf16.mxu0 0
    %284 = vmatmul.mubr.bf16.gmra.mrb[0].mxu0 %v83
    %v285 = vpop.f32.mrb[0].mxu0
    %v286 = vadd.f32 %v169, %v285
    %v287 = vpop.f32.mrb[0].mxu0
    %v288 = vadd.f32 %v173, %v287
    %v289 = vpop.f32.mrb[0].mxu0
    %v290 = vadd.f32 %v169, %v289
    %v291 = vpop.f32.mrb[0].mxu0
    %v292 = vadd.f32 %v173, %v291
    %293 = vmatprep.mubr.bf16.mxu0 0
    %294 = vmatmul.mubr.bf16.gmra.mrb[0].mxu0 %v84
    %v295 = vpop.f32.mrb[0].mxu0
    %v296 = vadd.f32 %v169, %v295
    %v297 = vpop.f32.mrb[0].mxu0
    %v298 = vadd.f32 %v173, %v297
    %v299 = vpop.f32.mrb[0].mxu0
    %v300 = vadd.f32 %v169, %v299
    %v301 = vpop.f32.mrb[0].mxu0
    %v302 = vadd.f32 %v173, %v301
    %303 = vmatprep.mubr.bf16.mxu0 0
    %304 = vmatmul.mubr.bf16.gmra.mrb[0].mxu0 %v85
    %v305 = vpop.f32.mrb[0].mxu0
    %v306 = vadd.f32 %v169, %v305
    %v307 = vpop.f32.mrb[0].mxu0
    %v308 = vadd.f32 %v173, %v307
    %v309 = vpop.f32.mrb[0].mxu0
    %v310 = vadd.f32 %v169, %v309
    %v311 = vpop.f32.mrb[0].mxu0
    %v312 = vadd.f32 %v173, %v311
    %313 = vmatprep.mubr.bf16.mxu0 0
    %314 = vmatmul.mubr.bf16.gmra.mrb[0].mxu0 %v86
    %v315 = vpop.f32.mrb[0].mxu0
    %v316 = vadd.f32 %v169, %v315
    %v317 = vpop.f32.mrb[0].mxu0
    %v318 = vadd.f32 %v173, %v317
    %v319 = vpop.f32.mrb[0].mxu0
    %v320 = vadd.f32 %v169, %v319
    %v321 = vpop.f32.mrb[0].mxu0
    %v322 = vadd.f32 %v173, %v321
    %323 = vmatprep.mubr.bf16.mxu0 0
    %324 = vmatmul.mubr.bf16.gmra.mrb[0].mxu0 %v87
    %v325 = vpop.f32.mrb[0].mxu0
    %v326 = vadd.f32 %v169, %v325
    %v327 = vpop.f32.mrb[0].mxu0
    %v328 = vadd.f32 %v173, %v327
    %v329 = vpop.f32.mrb[0].mxu0
    %v330 = vadd.f32 %v169, %v329
    %v331 = vpop.f32.mrb[0].mxu0
    %v332 = vadd.f32 %v173, %v331
    %333 = vmatprep.mubr.bf16.mxu0 0
    %334 = vmatmul.mubr.bf16.gmra.mrb[0].mxu0 %v88
    %v335 = vpop.f32.mrb[0].mxu0
    %v336 = vadd.f32 %v169, %v335
    %v337 = vpop.f32.mrb[0].mxu0
    %v338 = vadd.f32 %v173, %v337
    %v339 = vpop.f32.mrb[0].mxu0
    %v340 = vadd.f32 %v169, %v339
    %v341 = vpop.f32.mrb[0].mxu0
    %v342 = vadd.f32 %v173, %v341
    %343 = vmatprep.mubr.bf16.mxu0 0
    %344 = vmatmul.mubr.bf16.gmra.mrb[0].mxu0 %v89
    %v345 = vpop.f32.mrb[0].mxu0
    %v346 = vadd.f32 %v169, %v345
    %v347 = vpop.f32.mrb[0].mxu0
    %v348 = vadd.f32 %v173, %v347
    %v349 = vpop.f32.mrb[0].mxu0
    %v350 = vadd.f32 %v169, %v349
    %v351 = vpop.f32.mrb[0].mxu0
    %v352 = vadd.f32 %v173, %v351
    %353 = vmatprep.mubr.bf16.mxu0 0
    %354 = vmatmul.mubr.bf16.gmra.mrb[0].mxu0 %v90
    %v355 = vpop.f32.mrb[0].mxu0
    %v356 = vadd.f32 %v169, %v355
    %v357 = vpop.f32.mrb[0].mxu0
    %v358 = vadd.f32 %v173, %v357
    %v359 = vpop.f32.mrb[0].mxu0
    %v360 = vadd.f32 %v169, %v359
    %v361 = vpop.f32.mrb[0].mxu0
    %v362 = vadd.f32 %v173, %v361
    %363 = vmatprep.mubr.bf16.mxu0 0
    %364 = vmatmul.mubr.bf16.gmra.mrb[0].mxu0 %v91
    %v365 = vpop.f32.mrb[0].mxu0
    %v366 = vadd.f32 %v169, %v365
    %v367 = vpop.f32.mrb[0].mxu0
    %v368 = vadd.f32 %v173, %v367
    %v369 = vpop.f32.mrb[0].mxu0
    %v370 = vadd.f32 %v169, %v369
    %v371 = vpop.f32.mrb[0].mxu0
    %v372 = vadd.f32 %v173, %v371
    %373 = vdwg.mxu0
    %374 = vmatprep.subr.bf16.mxu0 0
    %375 = vmatpush1.bf16.msra.mxu0 %v142
    %376 = vmatprep.subr.bf16.mxu0 0
    %377 = vmatpush1.bf16.msra.mxu0 %v145
    %378 = vmatprep.subr.bf16.mxu0 0
    %379 = vmatpush1.bf16.msra.mxu0 %v148
    %380 = vmatprep.subr.bf16.mxu0 0
    %381 = vmatpush1.bf16.msra.mxu0 %v151
    %382 = vmatprep.subr.bf16.mxu0 0
    %383 = vmatpush1.bf16.msra.mxu0 %v154
    %384 = vmatprep.subr.bf16.mxu0 0
    %385 = vmatpush1.bf16.msra.mxu0 %v157
    %386 = vmatprep.subr.bf16.mxu0 0
    %387 = vmatpush1.bf16.msra.mxu0 %v160
    %388 = vmatprep.subr.bf16.mxu0 0
    %389 = vmatpush1.bf16.msra.mxu0 %v163
    %390 = vmatprep.subr.bf16.mxu0 0
    %391 = vmatpush1.bf16.msra.mxu0 0
    %392 = vmatprep.subr.bf16.mxu0 0
    %393 = vmatpush1.bf16.msra.mxu0 0
    %394 = vmatprep.subr.bf16.mxu0 0
    %395 = vmatpush1.bf16.msra.mxu0 0
    %396 = vmatprep.subr.bf16.mxu0 0
    %397 = vmatpush1.bf16.msra.mxu0 0
    %398 = vmatprep.subr.bf16.mxu0 0
    %399 = vmatpush1.bf16.msra.mxu0 0
    %400 = vmatprep.subr.bf16.mxu0 0
    %401 = vmatpush1.bf16.msra.mxu0 0
    %402 = vmatprep.subr.bf16.mxu0 0
    %403 = vmatpush1.bf16.msra.mxu0 0
    %404 = vmatprep.subr.bf16.mxu0 0
    %405 = vmatpush1.bf16.msra.mxu0 0
    %406 = vmatprep.mubr.bf16.mxu0 0
    %407 = vmatmul.mubr.bf16.gmra.mrb[0].mxu0 %v76
    %v408 = vpop.f32.mrb[0].mxu0
    %v409 = vadd.f32 %v177, %v408
    %v410 = vpop.f32.mrb[0].mxu0
    %v411 = vpop.f32.mrb[0].mxu0
    %v412 = vadd.f32 %v177, %v411
    %v413 = vpop.f32.mrb[0].mxu0
    %414 = vmatprep.mubr.bf16.mxu0 0
    %415 = vmatmul.mubr.bf16.gmra.mrb[0].mxu0 %v77
    %v416 = vpop.f32.mrb[0].mxu0
    %v417 = vadd.f32 %v177, %v416
    %v418 = vpop.f32.mrb[0].mxu0
    %v419 = vpop.f32.mrb[0].mxu0
    %v420 = vadd.f32 %v177, %v419
    %v421 = vpop.f32.mrb[0].mxu0
    %422 = vmatprep.mubr.bf16.mxu0 0
    %423 = vmatmul.mubr.bf16.gmra.mrb[0].mxu0 %v78
    %v424 = vpop.f32.mrb[0].mxu0
    %v425 = vadd.f32 %v177, %v424
    %v426 = vpop.f32.mrb[0].mxu0
    %v427 = vpop.f32.mrb[0].mxu0
    %v428 = vadd.f32 %v177, %v427
    %v429 = vpop.f32.mrb[0].mxu0
    %430 = vmatprep.mubr.bf16.mxu0 0
    %431 = vmatmul.mubr.bf16.gmra.mrb[0].mxu0 %v79
    %v432 = vpop.f32.mrb[0].mxu0
    %v433 = vadd.f32 %v177, %v432
    %v434 = vpop.f32.mrb[0].mxu0
    %v435 = vpop.f32.mrb[0].mxu0
    %v436 = vadd.f32 %v177, %v435
    %v437 = vpop.f32.mrb[0].mxu0
    %438 = vmatprep.mubr.bf16.mxu0 0
    %439 = vmatmul.mubr.bf16.gmra.mrb[0].mxu0 %v80
    %v440 = vpop.f32.mrb[0].mxu0
    %v441 = vadd.f32 %v177, %v440
    %v442 = vpop.f32.mrb[0].mxu0
    %v443 = vpop.f32.mrb[0].mxu0
    %v444 = vadd.f32 %v177, %v443
    %v445 = vpop.f32.mrb[0].mxu0
    %446 = vmatprep.mubr.bf16.mxu0 0
    %447 = vmatmul.mubr.bf16.gmra.mrb[0].mxu0 %v81
    %v448 = vpop.f32.mrb[0].mxu0
    %v449 = vadd.f32 %v177, %v448
    %v450 = vpop.f32.mrb[0].mxu0
    %v451 = vpop.f32.mrb[0].mxu0
    %v452 = vadd.f32 %v177, %v451
    %v453 = vpop.f32.mrb[0].mxu0
    %454 = vmatprep.mubr.bf16.mxu0 0
    %455 = vmatmul.mubr.bf16.gmra.mrb[0].mxu0 %v82
    %v456 = vpop.f32.mrb[0].mxu0
    %v457 = vadd.f32 %v177, %v456
    %v458 = vpop.f32.mrb[0].mxu0
    %v459 = vpop.f32.mrb[0].mxu0
    %v460 = vadd.f32 %v177, %v459
    %v461 = vpop.f32.mrb[0].mxu0
    %462 = vmatprep.mubr.bf16.mxu0 0
    %463 = vmatmul.mubr.bf16.gmra.mrb[0].mxu0 %v83
    %v464 = vpop.f32.mrb[0].mxu0
    %v465 = vadd.f32 %v177, %v464
    %v466 = vpop.f32.mrb[0].mxu0
    %v467 = vpop.f32.mrb[0].mxu0
    %v468 = vadd.f32 %v177, %v467
    %v469 = vpop.f32.mrb[0].mxu0
    %470 = vmatprep.mubr.bf16.mxu0 0
    %471 = vmatmul.mubr.bf16.gmra.mrb[0].mxu0 %v84
    %v472 = vpop.f32.mrb[0].mxu0
    %v473 = vadd.f32 %v177, %v472
    %v474 = vpop.f32.mrb[0].mxu0
    %v475 = vpop.f32.mrb[0].mxu0
    %v476 = vadd.f32 %v177, %v475
    %v477 = vpop.f32.mrb[0].mxu0
    %478 = vmatprep.mubr.bf16.mxu0 0
    %479 = vmatmul.mubr.bf16.gmra.mrb[0].mxu0 %v85
    %v480 = vpop.f32.mrb[0].mxu0
    %v481 = vadd.f32 %v177, %v480
    %v482 = vpop.f32.mrb[0].mxu0
    %v483 = vpop.f32.mrb[0].mxu0
    %v484 = vadd.f32 %v177, %v483
    %v485 = vpop.f32.mrb[0].mxu0
    %486 = vmatprep.mubr.bf16.mxu0 0
    %487 = vmatmul.mubr.bf16.gmra.mrb[0].mxu0 %v86
    %v488 = vpop.f32.mrb[0].mxu0
    %v489 = vadd.f32 %v177, %v488
    %v490 = vpop.f32.mrb[0].mxu0
    %v491 = vpop.f32.mrb[0].mxu0
    %v492 = vadd.f32 %v177, %v491
    %v493 = vpop.f32.mrb[0].mxu0
    %494 = vmatprep.mubr.bf16.mxu0 0
    %495 = vmatmul.mubr.bf16.gmra.mrb[0].mxu0 %v87
    %v496 = vpop.f32.mrb[0].mxu0
    %v497 = vadd.f32 %v177, %v496
    %v498 = vpop.f32.mrb[0].mxu0
    %v499 = vpop.f32.mrb[0].mxu0
    %v500 = vadd.f32 %v177, %v499
    %v501 = vpop.f32.mrb[0].mxu0
    %502 = vmatprep.mubr.bf16.mxu0 0
    %503 = vmatmul.mubr.bf16.gmra.mrb[0].mxu0 %v88
    %v504 = vpop.f32.mrb[0].mxu0
    %v505 = vadd.f32 %v177, %v504
    %v506 = vpop.f32.mrb[0].mxu0
    %v507 = vpop.f32.mrb[0].mxu0
    %v508 = vadd.f32 %v177, %v507
    %v509 = vpop.f32.mrb[0].mxu0
    %510 = vmatprep.mubr.bf16.mxu0 0
    %511 = vmatmul.mubr.bf16.gmra.mrb[0].mxu0 %v89
    %v512 = vpop.f32.mrb[0].mxu0
    %v513 = vadd.f32 %v177, %v512
    %v514 = vpop.f32.mrb[0].mxu0
    %v515 = vpop.f32.mrb[0].mxu0
    %v516 = vadd.f32 %v177, %v515
    %v517 = vpop.f32.mrb[0].mxu0
    %518 = vmatprep.mubr.bf16.mxu0 0
    %519 = vmatmul.mubr.bf16.gmra.mrb[0].mxu0 %v90
    %v520 = vpop.f32.mrb[0].mxu0
    %v521 = vadd.f32 %v177, %v520
    %v522 = vpop.f32.mrb[0].mxu0
    %v523 = vpop.f32.mrb[0].mxu0
    %v524 = vadd.f32 %v177, %v523
    %v525 = vpop.f32.mrb[0].mxu0
    %526 = vmatprep.mubr.bf16.mxu0 0
    %527 = vmatmul.mubr.bf16.gmra.mrb[0].mxu0 %v91
    %v528 = vpop.f32.mrb[0].mxu0
    %v529 = vadd.f32 %v177, %v528
    %v530 = vpop.f32.mrb[0].mxu0
    %v531 = vpop.f32.mrb[0].mxu0
    %v532 = vadd.f32 %v177, %v531
    %v533 = vpop.f32.mrb[0].mxu0
    %534 = vdwg.mxu0
    %v535 = vpack.c.bf16 %v220, %v216
    %v536 = vpack.c.bf16 %v222, %v218
    %v537 = vpack.c.bf16 %v412, %v409
    %v538 = vpack.c.bf16 %v230, %v226
    %v539 = vpack.c.bf16 %v232, %v228
    %v540 = vpack.c.bf16 %v420, %v417
    %v541 = vpack.c.bf16 %v240, %v236
    %v542 = vpack.c.bf16 %v242, %v238
    %v543 = vpack.c.bf16 %v428, %v425
    %v544 = vpack.c.bf16 %v250, %v246
    %v545 = vpack.c.bf16 %v252, %v248
    %v546 = vpack.c.bf16 %v436, %v433
    %v547 = vpack.c.bf16 %v260, %v256
    %v548 = vpack.c.bf16 %v262, %v258
    %v549 = vpack.c.bf16 %v444, %v441
    %v550 = vpack.c.bf16 %v270, %v266
    %v551 = vpack.c.bf16 %v272, %v268
    %v552 = vpack.c.bf16 %v452, %v449
    %v553 = vpack.c.bf16 %v280, %v276
    %v554 = vpack.c.bf16 %v282, %v278
    %v555 = vpack.c.bf16 %v460, %v457
    %v556 = vpack.c.bf16 %v290, %v286
    %v557 = vpack.c.bf16 %v292, %v288
    %v558 = vpack.c.bf16 %v468, %v465
    %v559 = vpack.c.bf16 %v300, %v296
    %v560 = vpack.c.bf16 %v302, %v298
    %v561 = vpack.c.bf16 %v476, %v473
    %v562 = vpack.c.bf16 %v310, %v306
    %v563 = vpack.c.bf16 %v312, %v308
    %v564 = vpack.c.bf16 %v484, %v481
    %v565 = vpack.c.bf16 %v320, %v316
    %v566 = vpack.c.bf16 %v322, %v318
    %v567 = vpack.c.bf16 %v492, %v489
    %v568 = vpack.c.bf16 %v330, %v326
    %v569 = vpack.c.bf16 %v332, %v328
    %v570 = vpack.c.bf16 %v500, %v497
    %v571 = vpack.c.bf16 %v340, %v336
    %v572 = vpack.c.bf16 %v342, %v338
    %v573 = vpack.c.bf16 %v508, %v505
    %v574 = vpack.c.bf16 %v350, %v346
    %v575 = vpack.c.bf16 %v352, %v348
    %v576 = vpack.c.bf16 %v516, %v513
    %v577 = vpack.c.bf16 %v360, %v356
    %v578 = vpack.c.bf16 %v362, %v358
    %v579 = vpack.c.bf16 %v524, %v521
    %v580 = vpack.c.bf16 %v370, %v366
    %v581 = vpack.c.bf16 %v372, %v368
    %v582 = vpack.c.bf16 %v532, %v529
    %v631 = vunpack.c.l.b16 %v535
    %v632 = vunpack.c.l.b16 %v536
    %v633 = vunpack.c.l.b16 %v537
    %v634 = vunpack.c.h.b16 %v535
    %v635 = vunpack.c.h.b16 %v536
    %v636 = vunpack.c.h.b16 %v537
    %v637 = vunpack.c.l.b16 %v538
    %v638 = vunpack.c.l.b16 %v539
    %v639 = vunpack.c.l.b16 %v540
    %v640 = vunpack.c.h.b16 %v538
    %v641 = vunpack.c.h.b16 %v539
    %v642 = vunpack.c.h.b16 %v540
    %v643 = vunpack.c.l.b16 %v541
    %v644 = vunpack.c.l.b16 %v542
    %v645 = vunpack.c.l.b16 %v543
    %v646 = vunpack.c.h.b16 %v541
    %v647 = vunpack.c.h.b16 %v542
    %v648 = vunpack.c.h.b16 %v543
    %v649 = vunpack.c.l.b16 %v544
    %v650 = vunpack.c.l.b16 %v545
    %v651 = vunpack.c.l.b16 %v546
    %v652 = vunpack.c.h.b16 %v544
    %v653 = vunpack.c.h.b16 %v545
    %v654 = vunpack.c.h.b16 %v546
    %v655 = vunpack.c.l.b16 %v547
    %v656 = vunpack.c.l.b16 %v548
    %v657 = vunpack.c.l.b16 %v549
    %v658 = vunpack.c.h.b16 %v547
    %v659 = vunpack.c.h.b16 %v548
    %v660 = vunpack.c.h.b16 %v549
    %v661 = vunpack.c.l.b16 %v550
    %v662 = vunpack.c.l.b16 %v551
    %v663 = vunpack.c.l.b16 %v552
    %v664 = vunpack.c.h.b16 %v550
    %v665 = vunpack.c.h.b16 %v551
    %v666 = vunpack.c.h.b16 %v552
    %v667 = vunpack.c.l.b16 %v553
    %v668 = vunpack.c.l.b16 %v554
    %v669 = vunpack.c.l.b16 %v555
    %v670 = vunpack.c.h.b16 %v553
    %v671 = vunpack.c.h.b16 %v554
    %v672 = vunpack.c.h.b16 %v555
    %v673 = vunpack.c.l.b16 %v556
    %v674 = vunpack.c.l.b16 %v557
    %v675 = vunpack.c.l.b16 %v558
    %v676 = vunpack.c.h.b16 %v556
    %v677 = vunpack.c.h.b16 %v557
    %v678 = vunpack.c.h.b16 %v558
    %v679 = vunpack.c.l.b16 %v559
    %v680 = vunpack.c.l.b16 %v560
    %v681 = vunpack.c.l.b16 %v561
    %v682 = vunpack.c.h.b16 %v559
    %v683 = vunpack.c.h.b16 %v560
    %v684 = vunpack.c.h.b16 %v561
    %v685 = vunpack.c.l.b16 %v562
    %v686 = vunpack.c.l.b16 %v563
    %v687 = vunpack.c.l.b16 %v564
    %v688 = vunpack.c.h.b16 %v562
    %v689 = vunpack.c.h.b16 %v563
    %v690 = vunpack.c.h.b16 %v564
    %v691 = vunpack.c.l.b16 %v565
    %v692 = vunpack.c.l.b16 %v566
    %v693 = vunpack.c.l.b16 %v567
    %v694 = vunpack.c.h.b16 %v565
    %v695 = vunpack.c.h.b16 %v566
    %v696 = vunpack.c.h.b16 %v567
    %v697 = vunpack.c.l.b16 %v568
    %v698 = vunpack.c.l.b16 %v569
    %v699 = vunpack.c.l.b16 %v570
    %v700 = vunpack.c.h.b16 %v568
    %v701 = vunpack.c.h.b16 %v569
    %v702 = vunpack.c.h.b16 %v570
    %v703 = vunpack.c.l.b16 %v571
    %v704 = vunpack.c.l.b16 %v572
    %v705 = vunpack.c.l.b16 %v573
    %v706 = vunpack.c.h.b16 %v571
    %v707 = vunpack.c.h.b16 %v572
    %v708 = vunpack.c.h.b16 %v573
    %v709 = vunpack.c.l.b16 %v574
    %v710 = vunpack.c.l.b16 %v575
    %v711 = vunpack.c.l.b16 %v576
    %v712 = vunpack.c.h.b16 %v574
    %v713 = vunpack.c.h.b16 %v575
    %v714 = vunpack.c.h.b16 %v576
    %v715 = vunpack.c.l.b16 %v577
    %v716 = vunpack.c.l.b16 %v578
    %v717 = vunpack.c.l.b16 %v579
    %v718 = vunpack.c.h.b16 %v577
    %v719 = vunpack.c.h.b16 %v578
    %v720 = vunpack.c.h.b16 %v579
    %v721 = vunpack.c.l.b16 %v580
    %v722 = vunpack.c.l.b16 %v581
    %v723 = vunpack.c.l.b16 %v582
    %v724 = vunpack.c.h.b16 %v580
    %v725 = vunpack.c.h.b16 %v581
    %v726 = vunpack.c.h.b16 %v582
    %v727 = vpack.c.b16 %v632, %v631
    %v728 = vpack.c.b16 %v633, %v633
    %v729 = vpack.c.b16 %v635, %v634
    %v730 = vpack.c.b16 %v636, %v636
    %v731 = vpack.c.b16 %v638, %v637
    %v732 = vpack.c.b16 %v639, %v639
    %v733 = vpack.c.b16 %v641, %v640
    %v734 = vpack.c.b16 %v642, %v642
    %v735 = vpack.c.b16 %v644, %v643
    %v736 = vpack.c.b16 %v645, %v645
    %v737 = vpack.c.b16 %v647, %v646
    %v738 = vpack.c.b16 %v648, %v648
    %v739 = vpack.c.b16 %v650, %v649
    %v740 = vpack.c.b16 %v651, %v651
    %v741 = vpack.c.b16 %v653, %v652
    %v742 = vpack.c.b16 %v654, %v654
    %v743 = vpack.c.b16 %v656, %v655
    %v744 = vpack.c.b16 %v657, %v657
    %v745 = vpack.c.b16 %v659, %v658
    %v746 = vpack.c.b16 %v660, %v660
    %v747 = vpack.c.b16 %v662, %v661
    %v748 = vpack.c.b16 %v663, %v663
    %v749 = vpack.c.b16 %v665, %v664
    %v750 = vpack.c.b16 %v666, %v666
    %v751 = vpack.c.b16 %v668, %v667
    %v752 = vpack.c.b16 %v669, %v669
    %v753 = vpack.c.b16 %v671, %v670
    %v754 = vpack.c.b16 %v672, %v672
    %v755 = vpack.c.b16 %v674, %v673
    %v756 = vpack.c.b16 %v675, %v675
    %v757 = vpack.c.b16 %v677, %v676
    %v758 = vpack.c.b16 %v678, %v678
    %v759 = vpack.c.b16 %v680, %v679
    %v760 = vpack.c.b16 %v681, %v681
    %v761 = vpack.c.b16 %v683, %v682
    %v762 = vpack.c.b16 %v684, %v684
    %v763 = vpack.c.b16 %v686, %v685
    %v764 = vpack.c.b16 %v687, %v687
    %v765 = vpack.c.b16 %v689, %v688
    %v766 = vpack.c.b16 %v690, %v690
    %v767 = vpack.c.b16 %v692, %v691
    %v768 = vpack.c.b16 %v693, %v693
    %v769 = vpack.c.b16 %v695, %v694
    %v770 = vpack.c.b16 %v696, %v696
    %v771 = vpack.c.b16 %v698, %v697
    %v772 = vpack.c.b16 %v699, %v699
    %v773 = vpack.c.b16 %v701, %v700
    %v774 = vpack.c.b16 %v702, %v702
    %v775 = vpack.c.b16 %v704, %v703
    %v776 = vpack.c.b16 %v705, %v705
    %v777 = vpack.c.b16 %v707, %v706
    %v778 = vpack.c.b16 %v708, %v708
    %v779 = vpack.c.b16 %v710, %v709
    %v780 = vpack.c.b16 %v711, %v711
    %v781 = vpack.c.b16 %v713, %v712
    %v782 = vpack.c.b16 %v714, %v714
    %v783 = vpack.c.b16 %v716, %v715
    %v784 = vpack.c.b16 %v717, %v717
    %v785 = vpack.c.b16 %v719, %v718
    %v786 = vpack.c.b16 %v720, %v720
    %v787 = vpack.c.b16 %v722, %v721
    %v788 = vpack.c.b16 %v723, %v723
    %v789 = vpack.c.b16 %v725, %v724
    %v790 = vpack.c.b16 %v726, %v726
    %855 = vst [vmem:[#allocation7] sm:$0xff] %v727
    %856 = vst [vmem:[#allocation7 + $0x8] sm:$0xf] %v728
    %857 = vst [vmem:[#allocation7 + $0xc] sm:$0xff] %v729
    %858 = vst [vmem:[#allocation7 + $0x14] sm:$0xf] %v730
    %859 = vst [vmem:[#allocation7 + $0x18] sm:$0xff] %v731
    %860 = vst [vmem:[#allocation7 + $0x20] sm:$0xf] %v732
    %861 = vst [vmem:[#allocation7 + $0x24] sm:$0xff] %v733
    %862 = vst [vmem:[#allocation7 + $0x2c] sm:$0xf] %v734
    %863 = vst [vmem:[#allocation7 + $0x30] sm:$0xff] %v735
    %864 = vst [vmem:[#allocation7 + $0x38] sm:$0xf] %v736
    %865 = vst [vmem:[#allocation7 + $0x3c] sm:$0xff] %v737
    %866 = vst [vmem:[#allocation7 + $0x44] sm:$0xf] %v738
    %867 = vst [vmem:[#allocation7 + $0x48] sm:$0xff] %v739
    %868 = vst [vmem:[#allocation7 + $0x50] sm:$0xf] %v740
    %869 = vst [vmem:[#allocation7 + $0x54] sm:$0xff] %v741
    %870 = vst [vmem:[#allocation7 + $0x5c] sm:$0xf] %v742
    %871 = vst [vmem:[#allocation7 + $0x60] sm:$0xff] %v743
    %872 = vst [vmem:[#allocation7 + $0x68] sm:$0xf] %v744
    %873 = vst [vmem:[#allocation7 + $0x6c] sm:$0xff] %v745
    %874 = vst [vmem:[#allocation7 + $0x74] sm:$0xf] %v746
    %875 = vst [vmem:[#allocation7 + $0x78] sm:$0xff] %v747
    %876 = vst [vmem:[#allocation7 + $0x80] sm:$0xf] %v748
    %877 = vst [vmem:[#allocation7 + $0x84] sm:$0xff] %v749
    %878 = vst [vmem:[#allocation7 + $0x8c] sm:$0xf] %v750
    %879 = vst [vmem:[#allocation7 + $0x90] sm:$0xff] %v751
    %880 = vst [vmem:[#allocation7 + $0x98] sm:$0xf] %v752
    %881 = vst [vmem:[#allocation7 + $0x9c] sm:$0xff] %v753
    %882 = vst [vmem:[#allocation7 + $0xa4] sm:$0xf] %v754
    %883 = vst [vmem:[#allocation7 + $0xa8] sm:$0xff] %v755
    %884 = vst [vmem:[#allocation7 + $0xb0] sm:$0xf] %v756
    %885 = vst [vmem:[#allocation7 + $0xb4] sm:$0xff] %v757
    %886 = vst [vmem:[#allocation7 + $0xbc] sm:$0xf] %v758
    %887 = vst [vmem:[#allocation7 + $0xc0] sm:$0xff] %v759
    %888 = vst [vmem:[#allocation7 + $0xc8] sm:$0xf] %v760
    %889 = vst [vmem:[#allocation7 + $0xcc] sm:$0xff] %v761
    %890 = vst [vmem:[#allocation7 + $0xd4] sm:$0xf] %v762
    %891 = vst [vmem:[#allocation7 + $0xd8] sm:$0xff] %v763
    %892 = vst [vmem:[#allocation7 + $0xe0] sm:$0xf] %v764
    %893 = vst [vmem:[#allocation7 + $0xe4] sm:$0xff] %v765
    %894 = vst [vmem:[#allocation7 + $0xec] sm:$0xf] %v766
    %895 = vst [vmem:[#allocation7 + $0xf0] sm:$0xff] %v767
    %896 = vst [vmem:[#allocation7 + $0xf8] sm:$0xf] %v768
    %897 = vst [vmem:[#allocation7 + $0xfc] sm:$0xff] %v769
    %898 = vst [vmem:[#allocation7 + $0x104] sm:$0xf] %v770
    %899 = vst [vmem:[#allocation7 + $0x108] sm:$0xff] %v771
    %900 = vst [vmem:[#allocation7 + $0x110] sm:$0xf] %v772
    %901 = vst [vmem:[#allocation7 + $0x114] sm:$0xff] %v773
    %902 = vst [vmem:[#allocation7 + $0x11c] sm:$0xf] %v774
    %903 = vst [vmem:[#allocation7 + $0x120] sm:$0xff] %v775
    %904 = vst [vmem:[#allocation7 + $0x128] sm:$0xf] %v776
    %905 = vst [vmem:[#allocation7 + $0x12c] sm:$0xff] %v777
    %906 = vst [vmem:[#allocation7 + $0x134] sm:$0xf] %v778
    %907 = vst [vmem:[#allocation7 + $0x138] sm:$0xff] %v779
    %908 = vst [vmem:[#allocation7 + $0x140] sm:$0xf] %v780
    %909 = vst [vmem:[#allocation7 + $0x144] sm:$0xff] %v781
    %910 = vst [vmem:[#allocation7 + $0x14c] sm:$0xf] %v782
    %911 = vst [vmem:[#allocation7 + $0x150] sm:$0xff] %v783
    %912 = vst [vmem:[#allocation7 + $0x158] sm:$0xf] %v784
    %913 = vst [vmem:[#allocation7 + $0x15c] sm:$0xff] %v785
    %914 = vst [vmem:[#allocation7 + $0x164] sm:$0xf] %v786
    %915 = vst [vmem:[#allocation7 + $0x168] sm:$0xff] %v787
    %916 = vst [vmem:[#allocation7 + $0x170] sm:$0xf] %v788
    %917 = vst [vmem:[#allocation7 + $0x174] sm:$0xff] %v789
    %918 = vst [vmem:[#allocation7 + $0x17c] sm:$0xf] %v790
    // Predicated region
    $region22: #{tpu_custom_call.1} parent=1 // pred_check
      _
    $region23: #{tpu_custom_call.1} parent=1 // pred_check_branch
      %920 = sbr.rel (0) target = $region25
    $region24: #{tpu_custom_call.1} parent=1 // pred_region
      %s922 = ssub.s32 6144, 6144
      %923 = vsyncadd [#allocation4], %s922
      %s924 = sshll.u32 [#allocation7], 4
      %s925 = int_to_ptr.vmem [resolvable:$true] %s924
      %930 = dma.vmem_to_hbm [thread:$0]  %s925, 6144, %s3, [#allocation4], 192, 192, 12
    $region25: #{tpu_custom_call.1} parent=1 // pred_fallthru
      _
    // Predicated region
    $region26: #{tpu_custom_call.1} parent=1 // pred_check
      _
    $region27: #{tpu_custom_call.1} parent=1 // pred_check_branch
      %932 = sbr.rel (0) target = $region29
    $region28: #{tpu_custom_call.1} parent=1 // pred_region
      %933 = dma.done [#allocation4], 6144
    $region29: #{tpu_custom_call.1} parent=1 // pred_fallthru
      _
    %934 = vsyncpa [#allocation3], 1
    %935 = vsyncpa [#allocation6], 1
    %936 = vsyncpa [#allocation4], 1

</llo_original>
